<compile_context>
chip_gen: v5e
topology: v5e:2x2
jax: 0.10.0
libtpu: 0.0.40
codegen_flags: <defaults>
</compile_context>

<pallas_src>
import math
import functools

import jax
import jax.numpy as jnp
from jax.experimental import pallas as pl
from jax.experimental.pallas import tpu as pltpu

_LANES = 128
_SUBLANES = 8
_TARGET_TILE_BYTES = 4 * 1024 * 1024      # per-block input bytes (raised from 2 MiB)
_VMEM_LIMIT_BYTES = 32 * 1024 * 1024      # explicit scoped-VMEM; safe on v5e/v6e/v7x
_RAGGED_MAX_TILE = 64 * 1024              # lane-tile size for the (1, n) ragged path


def _round_up(x, m):
    return ((x + m - 1) // m) * m


@functools.lru_cache(maxsize=1)
def _bf16_native_ok() -> bool:
    """bf16 VPU/EUP exist on v6e / v7x; v5e and older must upcast to f32."""
    try:
        kind = jax.devices()[0].device_kind.lower()
    except Exception:
        return False
    return ("v6" in kind) or ("v7" in kind) or ("7x" in kind)


def _gaussian_kernel(x_ref, o_ref, *, mean, sigma, compute_dtype):
    cd = compute_dtype
    x = x_ref[...].astype(cd)
    # Compile-time constants; normalization folded into the exponent so there
    # is no post-exp multiply (EUP exp is a separate bundle slot -> free).
    inv_two_var = 1.0 / (2.0 * sigma * sigma)
    log_norm = -0.5 * math.log(2.0 * math.pi * sigma * sigma)
    d = x - jnp.asarray(mean, cd)
    e = jnp.asarray(log_norm, cd) - (d * d) * jnp.asarray(inv_two_var, cd)
    o_ref[...] = jnp.exp(e).astype(o_ref.dtype)


class Gaussian:
    """JAX/Pallas equivalent of the PyTorch Gaussian module."""

    def __init__(self, mean: float, sigma: float):
        self.mean = float(mean)
        self.sigma = float(sigma)

    def __call__(self, x: jax.Array) -> jax.Array:
        orig_shape = x.shape
        in_dtype = x.dtype

        if jnp.issubdtype(in_dtype, jnp.floating):
            out_dtype = in_dtype
        elif jnp.issubdtype(in_dtype, jnp.integer):
            # Integers go straight into the kernel (no wrapper-side cast, which
            # would be an extra full HBM read+write); convert in-register.
            out_dtype = jnp.float32
        else:
            # Exotic dtypes (bool/complex): rare path, one wrapper-side cast.
            x = x.astype(jnp.float32)
            in_dtype = jnp.float32
            out_dtype = jnp.float32

        # bf16-native compute only where the VPU/EUP support it (v6e/v7x);
        # everything else computes in f32 in-register.
        if in_dtype == jnp.bfloat16 and _bf16_native_ok():
            compute_dtype = jnp.bfloat16
        else:
            compute_dtype = jnp.float32

        n = x.size
        if n == 0:
            return jnp.zeros(orig_shape, out_dtype)

        kernel = functools.partial(
            _gaussian_kernel, mean=self.mean, sigma=self.sigma,
            compute_dtype=compute_dtype)

        itemsize = jnp.dtype(in_dtype).itemsize

        if n % _LANES == 0:
            # Lane-dense (rows, 128) slab -- free reshape, no pad / slice.
            rows = n // _LANES
            arr = x.reshape(rows, _LANES)

            target_rows = max(
                _SUBLANES,
                (_TARGET_TILE_BYTES // (_LANES * itemsize))
                // _SUBLANES * _SUBLANES)
            tile_rows = min(rows, target_rows)
            # Guarantee >= 2 grid steps whenever possible so the "parallel"
            # axis shards across both TensorCores on v7x.
            if rows >= 2 * _SUBLANES:
                half_rows = _round_up(pl.cdiv(rows, 2), _SUBLANES)
                tile_rows = min(tile_rows, half_rows)
            grid = (pl.cdiv(rows, tile_rows),)
            block = (tile_rows, _LANES)
            index_map = lambda i: (i, 0)
            out_shape = jax.ShapeDtypeStruct((rows, _LANES), out_dtype)
        else:
            # Ragged size: present as (1, n) and tile along lanes.  The last
            # (or only) block may be partial -> masked store, no pad / slice.
            arr = x.reshape(1, n)
            tile_n = n if n <= _RAGGED_MAX_TILE else _RAGGED_MAX_TILE
            grid = (pl.cdiv(n, tile_n),)
            block = (1, tile_n)
            index_map = lambda i: (0, i)
            out_shape = jax.ShapeDtypeStruct((1, n), out_dtype)

        out = pl.pallas_call(
            kernel,
            out_shape=out_shape,
            grid_spec=pltpu.PrefetchScalarGridSpec(
                num_scalar_prefetch=0,
                grid=grid,
                in_specs=[pl.BlockSpec(block, index_map)],
                out_specs=pl.BlockSpec(block, index_map),
            ),
            compiler_params=pltpu.CompilerParams(
                dimension_semantics=("parallel",),
                vmem_limit_bytes=_VMEM_LIMIT_BYTES,
            ),
        )(arr)

        return out.reshape(orig_shape)


def _reference(x, mean, sigma):
    xf = x.astype(jnp.float32)
    coeff = 1.0 / math.sqrt(2.0 * math.pi * sigma * sigma)
    return jnp.float32(coeff) * jnp.exp(
        -((xf - jnp.float32(mean)) ** 2) / jnp.float32(2.0 * sigma * sigma))


if __name__ == "__main__":
    mean, sigma = 0.5, 1.3
    module = Gaussian(mean, sigma)
    key = jax.random.PRNGKey(0)
    k1, k2, k3, k4 = jax.random.split(key, 4)

    # 1) Primary: NCHW-style f32 input (aligned slab path, 2-step grid).
    x1 = jax.random.normal(k1, (2, 4, 16, 16), dtype=jnp.float32)
    o1 = jax.block_until_ready(module(x1))
    r1 = _reference(x1, mean, sigma)
    assert o1.shape == x1.shape and o1.dtype == x1.dtype
    assert jnp.allclose(o1, r1, atol=1e-5, rtol=1e-5)

    # 2) Partial last block along rows (rows=40, tile=24 -> 2 steps, masked tail).
    x2 = jax.random.normal(k2, (5, 8, 128), dtype=jnp.float32)
    o2 = jax.block_until_ready(module(x2))
    r2 = _reference(x2, mean, sigma)
    assert o2.shape == x2.shape and o2.dtype == x2.dtype
    assert jnp.allclose(o2, r2, atol=1e-5, rtol=1e-5)

    # 3) Ragged bf16 input (n=105 -> (1, n) single block; dtype preserved).
    x3 = jax.random.normal(k3, (3, 5, 7), dtype=jnp.bfloat16)
    o3 = jax.block_until_ready(module(x3))
    r3 = _reference(x3, mean, sigma).astype(jnp.bfloat16)
    assert o3.shape == x3.shape and o3.dtype == x3.dtype
    assert jnp.allclose(o3.astype(jnp.float32), r3.astype(jnp.float32),
                        atol=3e-2, rtol=3e-2)

    # 4) Ragged int32 input passed straight to the kernel (f32 output).
    x4 = jax.random.randint(k4, (4, 33), minval=-3, maxval=4, dtype=jnp.int32)
    o4 = jax.block_until_ready(module(x4))
    r4 = _reference(x4, mean, sigma)
    assert o4.shape == x4.shape and o4.dtype == jnp.float32
    assert jnp.allclose(o4, r4, atol=1e-5, rtol=1e-5)

    print("KERNEL_OK")
</pallas_src>

<mosaic_0001>
module attributes {stable_mosaic.version = 11 : i64} {
  func.func @_gaussian_kernel(%arg0: i32, %arg1: memref<8x128xf32, #tpu.memory_space<vmem>>, %arg2: memref<8x128xf32, #tpu.memory_space<vmem>>) attributes {dimension_semantics = [#tpu.dimension_semantics<parallel>], iteration_bounds = array<i64: 2>, scalar_prefetch = 0 : i64, scratch_operands = 0 : i64, tpu.core_type = #tpu.core_type<tc>, window_params = [{transform_indices = @transform_0, window_bounds = array<i64: 8, 128>}, {transform_indices = @transform_1, window_bounds = array<i64: 8, 128>}]} {
    %c0 = arith.constant 0 : index
    %c0_0 = arith.constant 0 : index
    %0 = vector.load %arg1[%c0, %c0_0] : memref<8x128xf32, #tpu.memory_space<vmem>>, vector<8x128xf32>
    %cst = arith.constant 5.000000e-01 : f32
    %1 = vector.broadcast %cst : f32 to vector<8x128xf32>
    %2 = arith.subf %0, %1 : vector<8x128xf32>
    %3 = arith.mulf %2, %2 : vector<8x128xf32>
    %cst_1 = arith.constant 2.958580e-01 : f32
    %4 = vector.broadcast %cst_1 : f32 to vector<8x128xf32>
    %5 = arith.mulf %3, %4 : vector<8x128xf32>
    %cst_2 = arith.constant -1.18130279 : f32
    %6 = vector.broadcast %cst_2 : f32 to vector<8x128xf32>
    %7 = arith.subf %6, %5 : vector<8x128xf32>
    %8 = math.exp %7 : vector<8x128xf32>
    %c0_3 = arith.constant 0 : index
    %c0_4 = arith.constant 0 : index
    %9 = vector.load %arg2[%c0_3, %c0_4] : memref<8x128xf32, #tpu.memory_space<vmem>>, vector<8x128xf32>
    tpu.vector_store %arg2[%c0_3, %c0_4], %8 {strides = array<i32>} : memref<8x128xf32, #tpu.memory_space<vmem>>, vector<8x128xf32>,
    return
  }
  func.func @transform_0(%arg0: i32) -> (i32, i32) {
    %c0_i32 = arith.constant 0 : i32
    %c0_i32_0 = arith.constant 0 : i32
    return %arg0, %c0_i32 : i32, i32
  }
  func.func @transform_1(%arg0: i32) -> (i32, i32) {
    %c0_i32 = arith.constant 0 : i32
    %c0_i32_0 = arith.constant 0 : i32
    return %arg0, %c0_i32 : i32, i32
  }
}

</mosaic_0001>

<llo_original>
// kernel: tpu_custom_call.1
$region0: #{tpu_custom_call.1}
  #allocation0 [shape = 'u32[]', space=smem, size = 0x4, offset = 0x4, fixed_abs, tag = 'smem constant byte address 0x4 - core index']
  #allocation1 [shape = 'u32[72,128]{1,0:T(1,128)}', space=vmem, size = 0x9000, scoped, tag = 'internal scratch']
  %s0 = inlined_call_operand.hbm [shape: f32[16,128], index: 0, kind: input, shape index: {}]
  %s1 = inlined_call_operand.hbm [shape: f32[16,128], index: 1, kind: output, shape index: {}]
  %s2 = sld [smem:[#allocation0]]
  $region41: #{tpu_custom_call.1} parent=0
    _
  %s4 = ssub.s32 1, %s2
  %s5 = scalar_select 0, %s4, %s2
  $region1: #{tpu_custom_call.1} parent=0
    #allocation2 [shape = 'u8[8192]{0}', space=vmem, size = 0x2000, scoped, tag = 'input window, operand 0']
    #allocation3 [shape = 's32[2]{0}', space=sflag, size = 0x8, scoped, tag = 'scoped memory for tpu_custom_call.1']
    #allocation4 [shape = 's32[2]{0}', space=sflag, size = 0x8, scoped, tag = 'scoped memory for tpu_custom_call.1']
    #allocation5 [shape = 'u8[8192]{0}', space=vmem, size = 0x2000, scoped, tag = 'output window, operand 0']
    %6 = vsyncpa [#allocation3], 0
    %s7 = scalar_lea.sflag [#allocation3], 1
    %8 = vsyncpa %s7, 0
    %9 = vsyncpa [#allocation4], 0
    %s10 = scalar_lea.sflag [#allocation4], 1
    %11 = vsyncpa %s10, 0
    loop: start=0, step=1, limit=4
    $region2: #{tpu_custom_call.1} parent=1 // loop_pre_header
      _
    $region3: #{tpu_custom_call.1} parent=1 // loop_header
      %s13 = sphi 0, %s17
      %p14 = scmp.ge.s32.totalorder %s13, 4
      %s23 = sphi 0, %s25
      %s26 = sphi 0, %s23
      %s27 = sphi 0, %s26
      %s43 = sphi 0, %s27
      %s49 = sphi 0, %s51
      %s52 = sphi 0, %s49
      %s53 = sphi 0, %s52
      %s69 = sphi 0, %s53
    $region4: #{tpu_custom_call.1} parent=1 // loop_header_branch
      %16 = sbr.rel (%p14) target = $region8
    $region5: #{tpu_custom_call.1} parent=1 // loop_body
      %s18 = ssub.s32 %s13, 1
      %s19 = ssub.s32 %s13, 2
      %s20 = sadd.s32 %s13, 1
      %s21 = ssub.s32 %s13, %s20
      %p22 = scmp.eq.s32.totalorder %s21, 0
      %s24 = sadd.s32 %s23, 1
      %s25 = scalar_select %p22, %s23, %s24
      %p28 = pneg %p22
      %p29 = scmp.eq.s32.totalorder %s13, 1
      %p30 = por %p28, %p29
      %p31 = scmp.ne.s32.totalorder %s23, %s26
      %p32 = scmp.eq.s32.totalorder %s13, 0
      %p33 = por %p31, %p32
      %p34 = scmp.ne.s32.totalorder %s23, %s26
      %p35 = scmp.eq.s32.totalorder %s18, 1
      %p36 = por %p34, %p35
      %p37 = scmp.ne.s32.totalorder %s26, %s27
      %p38 = scmp.eq.s32.totalorder %s18, 0
      %p39 = por %p37, %p38
      %p40 = scmp.ne.s32.totalorder %s26, %s27
      %p41 = scmp.eq.s32.totalorder %s19, 1
      %p42 = por %p40, %p41
      %p44 = scmp.ne.s32.totalorder %s27, %s43
      %p45 = scmp.eq.s32.totalorder %s19, 0
      %p46 = por %p44, %p45
      %s47 = ssub.s32 %s13, %s20
      %p48 = scmp.eq.s32.totalorder %s47, 0
      %s50 = sadd.s32 %s49, 1
      %s51 = scalar_select %p48, %s49, %s50
      %p54 = pneg %p48
      %p55 = scmp.eq.s32.totalorder %s13, 1
      %p56 = por %p54, %p55
      %p57 = scmp.ne.s32.totalorder %s49, %s52
      %p58 = scmp.eq.s32.totalorder %s13, 0
      %p59 = por %p57, %p58
      %p60 = scmp.ne.s32.totalorder %s49, %s52
      %p61 = scmp.eq.s32.totalorder %s18, 1
      %p62 = por %p60, %p61
      %p63 = scmp.ne.s32.totalorder %s52, %s53
      %p64 = scmp.eq.s32.totalorder %s18, 0
      %p65 = por %p63, %p64
      %p66 = scmp.ne.s32.totalorder %s52, %s53
      %p67 = scmp.eq.s32.totalorder %s19, 1
      %p68 = por %p66, %p67
      %p70 = scmp.ne.s32.totalorder %s53, %s69
      %p71 = scmp.eq.s32.totalorder %s19, 0
      %p72 = por %p70, %p71
      %p73 = scmp.le.s32.totalorder 1, %s13
      %p74 = scmp.lt.s32.totalorder %s13, 3
      %p75 = pnand %p73, %p74
      %p76 = pneg %p75
      // Predicated region
      $region9: #{tpu_custom_call.1} parent=5 // pred_check
        _
      $region10: #{tpu_custom_call.1} parent=5 // pred_check_branch
        %78 = sbr.rel (%p75) target = $region12
      $region11: #{tpu_custom_call.1} parent=5 // pred_region
        %s79 = ssub.s32 %s13, 1
      $region12: #{tpu_custom_call.1} parent=5 // pred_fallthru
        _
      %p80 = scmp.lt.s32.totalorder %s13, 2
      // Predicated region
      $region13: #{tpu_custom_call.1} parent=5 // pred_check
        %p81 = pneg %p80
      $region14: #{tpu_custom_call.1} parent=5 // pred_check_branch
        %83 = sbr.rel (%p81) target = $region16
      $region15: #{tpu_custom_call.1} parent=5 // pred_region
        // Predicated region
        $region17: #{tpu_custom_call.1} parent=15 // pred_check
          %p84 = pneg %p33
        $region18: #{tpu_custom_call.1} parent=15 // pred_check_branch
          %86 = sbr.rel (%p84) target = $region20
        $region19: #{tpu_custom_call.1} parent=15 // pred_region
          %s87 = sand.u32 %s23, 1
          %s88 = scalar_lea.sflag [#allocation3], %s87
          %s89 = sand.u32 %s23, 1
          %s90 = smul.addr %s89, 8
          %s91 = scalar_lea.vmem [#allocation2], %s90
          %93 = vsyncadd %s88, 0
          %s94 = smul.addr %s13, 8
          %s95 = scalar_lea.hbm %s0, %s94
          %s97 = sshll.u32 %s95, 4
          %s98 = int_to_ptr.hbm [resolvable:$true] %s97
          %s99 = sshll.u32 %s91, 4
          %s100 = int_to_ptr.vmem [resolvable:$true] %s99
          %102 = dma.hbm_to_vmem [thread:$0]  %s98, 128, %s100, %s88
        $region20: #{tpu_custom_call.1} parent=15 // pred_fallthru
          _
      $region16: #{tpu_custom_call.1} parent=5 // pred_fallthru
        _
      %p103 = scmp.le.s32.totalorder 1, %s13
      %p104 = scmp.lt.s32.totalorder %s13, 3
      %p105 = pnand %p103, %p104
      %p106 = pneg %p105
      // Predicated region
      $region21: #{tpu_custom_call.1} parent=5 // pred_check
        _
      $region22: #{tpu_custom_call.1} parent=5 // pred_check_branch
        %108 = sbr.rel (%p105) target = $region24
      $region23: #{tpu_custom_call.1} parent=5 // pred_region
        %s109 = ssub.s32 %s13, 1
        %s110 = sand.u32 %s26, 1
        %s111 = scalar_lea.sflag [#allocation3], %s110
        %s112 = sand.u32 %s26, 1
        %s113 = smul.addr %s112, 8
        %s114 = scalar_lea.vmem [#allocation2], %s113
        // Predicated region
        $region25: #{tpu_custom_call.1} parent=23 // pred_check
          %p115 = pneg %p39
        $region26: #{tpu_custom_call.1} parent=23 // pred_check_branch
          %117 = sbr.rel (%p115) target = $region28
        $region27: #{tpu_custom_call.1} parent=23 // pred_region
          %119 = dma.done %s111, 128
        $region28: #{tpu_custom_call.1} parent=23 // pred_fallthru
          _
        %s120 = sand.u32 %s26, 1
        %s121 = scalar_lea.sflag [#allocation3], %s120
        %s122 = sand.u32 %s26, 1
        %s123 = smul.addr %s122, 8
        %s124 = scalar_lea.vmem [#allocation2], %s123
        %p125 = pneg %p39
        %p126 = pneg %p36
        %p127 = pneg %p65
        %p128 = pneg %p62
        %s129 = sand.u32 %s52, 1
        %s130 = scalar_lea.sflag [#allocation4], %s129
        %s131 = sand.u32 %s52, 1
        %s132 = smul.addr %s131, 8
        %s133 = scalar_lea.vmem [#allocation5], %s132
        %v134 = vld [vmem:[%s114] sm:$0xff]
        %v135 = vsub.f32 %v134, 0.5
        %v136 = vmul.f32 %v135, %v135
        %v137 = vmul.f32 %v136, 0.295858
        %v138 = vsub.f32 -1.1813028, %v137
        %v139 = vmul.f32 %v138, 1.442695
        %v140 = vpow.pop %v139
        %141 = vst [vmem:[%s133] sm:$0xff] %v140
        %s142 = sand.u32 %s52, 1
        %s143 = scalar_lea.sflag [#allocation4], %s142
        %s144 = sand.u32 %s52, 1
        %s145 = smul.addr %s144, 8
        %s146 = scalar_lea.vmem [#allocation5], %s145
        // Predicated region
        $region29: #{tpu_custom_call.1} parent=23 // pred_check
          %p147 = pneg %p62
        $region30: #{tpu_custom_call.1} parent=23 // pred_check_branch
          %149 = sbr.rel (%p147) target = $region32
        $region31: #{tpu_custom_call.1} parent=23 // pred_region
          %151 = vsyncadd %s143, 0
          %s152 = smul.addr %s18, 8
          %s153 = scalar_lea.hbm %s1, %s152
          %s155 = sshll.u32 %s146, 4
          %s156 = int_to_ptr.vmem [resolvable:$true] %s155
          %s157 = sshll.u32 %s153, 4
          %s158 = int_to_ptr.hbm [resolvable:$true] %s157
          %160 = dma.vmem_to_hbm [thread:$0]  %s156, 128, %s158, %s143
        $region32: #{tpu_custom_call.1} parent=23 // pred_fallthru
          _
      $region24: #{tpu_custom_call.1} parent=5 // pred_fallthru
        _
      %p161 = scmp.le.s32.totalorder 2, %s13
      // Predicated region
      $region33: #{tpu_custom_call.1} parent=5 // pred_check
        %p162 = pneg %p161
      $region34: #{tpu_custom_call.1} parent=5 // pred_check_branch
        %164 = sbr.rel (%p162) target = $region36
      $region35: #{tpu_custom_call.1} parent=5 // pred_region
        %s165 = ssub.s32 %s13, 2
        // Predicated region
        $region37: #{tpu_custom_call.1} parent=35 // pred_check
          %p166 = pneg %p68
        $region38: #{tpu_custom_call.1} parent=35 // pred_check_branch
          %168 = sbr.rel (%p166) target = $region40
        $region39: #{tpu_custom_call.1} parent=35 // pred_region
          %s169 = sand.u32 %s53, 1
          %s170 = scalar_lea.sflag [#allocation4], %s169
          %s171 = sand.u32 %s53, 1
          %s172 = smul.addr %s171, 8
          %s173 = scalar_lea.vmem [#allocation5], %s172
          %175 = dma.done %s170, 128
        $region40: #{tpu_custom_call.1} parent=35 // pred_fallthru
          _
      $region36: #{tpu_custom_call.1} parent=5 // pred_fallthru
        _
    $region6: #{tpu_custom_call.1} parent=1 // loop_footer
      %s17 = sadd.s32 1, %s13
    $region7: #{tpu_custom_call.1} parent=1 // loop_footer_branch
      %12 = sbr.rel target = $region3
    $region8: #{tpu_custom_call.1} parent=1 // loop_exit
      _
    %176 = vsyncpa [#allocation3], 1
    %s177 = scalar_lea.sflag [#allocation3], 1
    %178 = vsyncpa %s177, 1
    %179 = vsyncpa [#allocation4], 1
    %s180 = scalar_lea.sflag [#allocation4], 1
    %181 = vsyncpa %s180, 1

</llo_original>
